<compile_context>
chip_gen: v7x
topology: tpu7x:2x2x1
jax: 0.10.0
libtpu: 0.0.40
codegen_flags: <defaults>
</compile_context>

<pallas_src>
import jax
import jax.numpy as jnp
from jax.experimental import pallas as pl
from jax.experimental.pallas import tpu as pltpu


# ---------------------------------------------------------------------------
# Config (small, consistent with the module's __init__ signature)
# ---------------------------------------------------------------------------
BATCH = 8
OBS_DIM = 32
ACTION_DIM = 4
HIDDEN_DIM = 32
HIDDEN_DEPTH = 2                 # -> Linear,ReLU, Linear,ReLU, Linear
LOG_STD_BOUNDS = (-5.0, 2.0)
MAX_BATCH_TILE = 512             # batch rows per grid step (HBM-roofline friendly)
# TODO(synk): layer_norm=True variant of utils.mlp not implemented (default is False).
# TODO(synk): for very large RL batches on v6e/v7x, cast obs/weight slabs to bf16
#             (keep f32 accumulation); kept f32 here for exact reference checking.


def actor_kernel(obs_ref, p0_ref, p1_ref, pmu_ref, pls_ref, out_ref):
    """Fused MLP trunk + diag-Gaussian head.

    p*_ref are [in_features + 1, out_features] slabs: rows [:in] are the
    weight, row [in] is the bias.  All slices are sublane slices at 8-aligned
    offsets (no masked lane shuffles).  Output is one lane-packed tile
    [Bt, 3*A] = (mu | std | tanh(mu)).
    """
    lmin, lmax = LOG_STD_BOUNDS
    d_in = p0_ref.shape[0] - 1        # obs_dim  (static)
    d_h = p1_ref.shape[0] - 1         # hidden_dim (static)

    x = obs_ref[...]

    # Layer 0: Linear + ReLU
    h = jnp.dot(x, p0_ref[:d_in, :], preferred_element_type=jnp.float32)
    h = jnp.maximum(h + p0_ref[d_in:d_in + 1, :], 0.0)

    # Layer 1: Linear + ReLU
    h = jnp.dot(h, p1_ref[:d_h, :], preferred_element_type=jnp.float32)
    h = jnp.maximum(h + p1_ref[d_h:d_h + 1, :], 0.0)

    # Output head: two small MXU dots instead of one dot + sub-lane chunk slice.
    mu = jnp.dot(h, pmu_ref[:d_h, :], preferred_element_type=jnp.float32)
    mu = mu + pmu_ref[d_h:d_h + 1, :]
    log_std = jnp.dot(h, pls_ref[:d_h, :], preferred_element_type=jnp.float32)
    log_std = log_std + pls_ref[d_h:d_h + 1, :]

    log_std = jnp.tanh(log_std)
    log_std = lmin + 0.5 * (lmax - lmin) * (log_std + 1.0)
    std = jnp.exp(log_std)
    pi_mean = jnp.tanh(mu)            # SquashedNormal(mu, std).mean

    # Single lane-packed store -> one writeback DMA.
    out_ref[...] = jnp.concatenate([mu, std, pi_mean], axis=-1)


def pack_params(params):
    """Wrapper-side (free) repacking: split head, fold bias as the last row."""
    w0, b0, w1, b1, w2, b2 = params
    a = ACTION_DIM
    p0 = jnp.concatenate([w0, b0], axis=0)                       # [OBS+1, HID]
    p1 = jnp.concatenate([w1, b1], axis=0)                       # [HID+1, HID]
    pmu = jnp.concatenate([w2[:, :a], b2[:, :a]], axis=0)        # [HID+1, A]
    pls = jnp.concatenate([w2[:, a:], b2[:, a:]], axis=0)        # [HID+1, A]
    return p0, p1, pmu, pls


@jax.jit
def diag_gaussian_actor(obs, packed):
    """Batch-gridded pallas_call; returns (mu, std, tanh(mu))."""
    p0, p1, pmu, pls = packed
    B, obs_dim = obs.shape
    a = pmu.shape[-1]
    hid = p1.shape[-1]

    bt = min(MAX_BATCH_TILE, B)
    pad = (-B) % bt
    if pad:
        obs = jnp.pad(obs, ((0, pad), (0, 0)))
    bp = B + pad
    grid = (bp // bt,)

    def full_spec(p):
        # Weights replicated across the batch grid (resident in VMEM).
        return pl.BlockSpec(p.shape, lambda i: (0, 0))

    cost = pl.CostEstimate(
        flops=2 * bp * (obs_dim * hid + hid * hid + hid * 2 * a),
        transcendentals=bp * 3 * a,
        bytes_accessed=4 * (bp * obs_dim + p0.size + p1.size
                            + pmu.size + pls.size + bp * 3 * a),
    )

    out = pl.pallas_call(
        actor_kernel,
        out_shape=jax.ShapeDtypeStruct((bp, 3 * a), jnp.float32),
        grid_spec=pltpu.PrefetchScalarGridSpec(
            num_scalar_prefetch=0,
            grid=grid,
            in_specs=[
                pl.BlockSpec((bt, obs_dim), lambda i: (i, 0)),
                full_spec(p0), full_spec(p1), full_spec(pmu), full_spec(pls),
            ],
            out_specs=pl.BlockSpec((bt, 3 * a), lambda i: (i, 0)),
        ),
        compiler_params=pltpu.CompilerParams(
            dimension_semantics=("parallel",),          # shard batch across TCs (v7x)
            vmem_limit_bytes=32 * 1024 * 1024,          # safe on v7x's 64 MiB VMEM
        ),
        cost_estimate=cost,
    )(obs, p0, p1, pmu, pls)

    out = out[:B]
    mu = out[:, :a]
    std = out[:, a:2 * a]
    pi_mean = out[:, 2 * a:]
    return mu, std, pi_mean


def init_params(key):
    """Deterministic synthetic parameters (shapes follow utils.mlp)."""
    ks = jax.random.split(key, 6)

    def lin(kw, fan_in, fan_out):
        scale = 1.0 / jnp.sqrt(jnp.float32(fan_in))
        return jax.random.normal(kw, (fan_in, fan_out), jnp.float32) * scale

    w0 = lin(ks[0], OBS_DIM, HIDDEN_DIM)
    b0 = jax.random.normal(ks[1], (1, HIDDEN_DIM), jnp.float32) * 0.01
    w1 = lin(ks[2], HIDDEN_DIM, HIDDEN_DIM)
    b1 = jax.random.normal(ks[3], (1, HIDDEN_DIM), jnp.float32) * 0.01
    w2 = lin(ks[4], HIDDEN_DIM, 2 * ACTION_DIM)
    b2 = jax.random.normal(ks[5], (1, 2 * ACTION_DIM), jnp.float32) * 0.01
    return (w0, b0, w1, b1, w2, b2)


def reference(obs, params):
    """Pure-JAX reference of the same forward pass."""
    w0, b0, w1, b1, w2, b2 = params
    h = jnp.maximum(obs @ w0 + b0, 0.0)
    h = jnp.maximum(h @ w1 + b1, 0.0)
    out = h @ w2 + b2
    mu, log_std = out[:, :ACTION_DIM], out[:, ACTION_DIM:]
    log_std = jnp.tanh(log_std)
    lmin, lmax = LOG_STD_BOUNDS
    log_std = lmin + 0.5 * (lmax - lmin) * (log_std + 1.0)
    return mu, jnp.exp(log_std), jnp.tanh(mu)


if __name__ == "__main__":
    key = jax.random.PRNGKey(0)
    k_obs, k_par = jax.random.split(key)
    obs = jax.random.normal(k_obs, (BATCH, OBS_DIM), jnp.float32)
    params = init_params(k_par)
    packed = pack_params(params)

    mu, std, pi_mean = diag_gaussian_actor(obs, packed)
    jax.block_until_ready((mu, std, pi_mean))

    mu_r, std_r, pi_r = reference(obs, params)
    assert jnp.allclose(mu, mu_r, atol=1e-5, rtol=1e-5)
    assert jnp.allclose(std, std_r, atol=1e-5, rtol=1e-5)
    assert jnp.allclose(pi_mean, pi_r, atol=1e-5, rtol=1e-5)

    print("KERNEL_OK")
</pallas_src>

<mosaic_0001>
module attributes {stable_mosaic.version = 11 : i64} {
  func.func @actor_kernel(%arg0: i32, %arg1: memref<8x32xf32, #tpu.memory_space<vmem>>, %arg2: memref<33x32xf32, #tpu.memory_space<vmem>>, %arg3: memref<33x32xf32, #tpu.memory_space<vmem>>, %arg4: memref<33x4xf32, #tpu.memory_space<vmem>>, %arg5: memref<33x4xf32, #tpu.memory_space<vmem>>, %arg6: memref<8x12xf32, #tpu.memory_space<vmem>>) attributes {dimension_semantics = [#tpu.dimension_semantics<parallel>], iteration_bounds = array<i64: 1>, scalar_prefetch = 0 : i64, scratch_operands = 0 : i64, tpu.core_type = #tpu.core_type<tc>, window_params = [{transform_indices = @transform_0, window_bounds = array<i64: 8, 32>}, {pipeline_mode = #tpu.pipeline_mode<synchronous>, transform_indices = @transform_1, window_bounds = array<i64: 33, 32>}, {pipeline_mode = #tpu.pipeline_mode<synchronous>, transform_indices = @transform_2, window_bounds = array<i64: 33, 32>}, {pipeline_mode = #tpu.pipeline_mode<synchronous>, transform_indices = @transform_3, window_bounds = array<i64: 33, 4>}, {pipeline_mode = #tpu.pipeline_mode<synchronous>, transform_indices = @transform_4, window_bounds = array<i64: 33, 4>}, {transform_indices = @transform_5, window_bounds = array<i64: 8, 12>}]} {
    %c0 = arith.constant 0 : index
    %c0_0 = arith.constant 0 : index
    %0 = vector.load %arg1[%c0, %c0_0] : memref<8x32xf32, #tpu.memory_space<vmem>>, vector<8x32xf32>
    %c0_1 = arith.constant 0 : index
    %c0_2 = arith.constant 0 : index
    %1 = vector.load %arg2[%c0_1, %c0_2] : memref<33x32xf32, #tpu.memory_space<vmem>>, vector<32x32xf32>
    %cst = arith.constant dense<0.000000e+00> : vector<8x32xf32>
    %2 = tpu.matmul %0, %1, %cst {dimension_numbers = #tpu.dot_dimension_numbers<[1], [0], [0], [1], [0, 0, 1, 1], [], []>} : vector<8x32xf32>, vector<32x32xf32>, vector<8x32xf32> -> vector<8x32xf32>
    %c32 = arith.constant 32 : index
    %c0_3 = arith.constant 0 : index
    %3 = vector.load %arg2[%c32, %c0_3] : memref<33x32xf32, #tpu.memory_space<vmem>>, vector<1x32xf32>
    %4 = vector.broadcast %3 : vector<1x32xf32> to vector<8x32xf32>
    %5 = arith.addf %2, %4 : vector<8x32xf32>
    %cst_4 = arith.constant 0.000000e+00 : f32
    %6 = vector.broadcast %cst_4 : f32 to vector<8x32xf32>
    %7 = arith.maximumf %5, %6 : vector<8x32xf32>
    %c0_5 = arith.constant 0 : index
    %c0_6 = arith.constant 0 : index
    %8 = vector.load %arg3[%c0_5, %c0_6] : memref<33x32xf32, #tpu.memory_space<vmem>>, vector<32x32xf32>
    %cst_7 = arith.constant dense<0.000000e+00> : vector<8x32xf32>
    %9 = tpu.matmul %7, %8, %cst_7 {dimension_numbers = #tpu.dot_dimension_numbers<[1], [0], [0], [1], [0, 0, 1, 1], [], []>} : vector<8x32xf32>, vector<32x32xf32>, vector<8x32xf32> -> vector<8x32xf32>
    %c32_8 = arith.constant 32 : index
    %c0_9 = arith.constant 0 : index
    %10 = vector.load %arg3[%c32_8, %c0_9] : memref<33x32xf32, #tpu.memory_space<vmem>>, vector<1x32xf32>
    %11 = vector.broadcast %10 : vector<1x32xf32> to vector<8x32xf32>
    %12 = arith.addf %9, %11 : vector<8x32xf32>
    %cst_10 = arith.constant 0.000000e+00 : f32
    %13 = vector.broadcast %cst_10 : f32 to vector<8x32xf32>
    %14 = arith.maximumf %12, %13 : vector<8x32xf32>
    %c0_11 = arith.constant 0 : index
    %c0_12 = arith.constant 0 : index
    %15 = vector.load %arg4[%c0_11, %c0_12] : memref<33x4xf32, #tpu.memory_space<vmem>>, vector<32x4xf32>
    %cst_13 = arith.constant dense<0.000000e+00> : vector<8x4xf32>
    %16 = tpu.matmul %14, %15, %cst_13 {dimension_numbers = #tpu.dot_dimension_numbers<[1], [0], [0], [1], [0, 0, 1, 1], [], []>} : vector<8x32xf32>, vector<32x4xf32>, vector<8x4xf32> -> vector<8x4xf32>
    %c32_14 = arith.constant 32 : index
    %c0_15 = arith.constant 0 : index
    %17 = vector.load %arg4[%c32_14, %c0_15] : memref<33x4xf32, #tpu.memory_space<vmem>>, vector<1x4xf32>
    %18 = vector.broadcast %17 : vector<1x4xf32> to vector<8x4xf32>
    %19 = arith.addf %16, %18 : vector<8x4xf32>
    %c0_16 = arith.constant 0 : index
    %c0_17 = arith.constant 0 : index
    %20 = vector.load %arg5[%c0_16, %c0_17] : memref<33x4xf32, #tpu.memory_space<vmem>>, vector<32x4xf32>
    %cst_18 = arith.constant dense<0.000000e+00> : vector<8x4xf32>
    %21 = tpu.matmul %14, %20, %cst_18 {dimension_numbers = #tpu.dot_dimension_numbers<[1], [0], [0], [1], [0, 0, 1, 1], [], []>} : vector<8x32xf32>, vector<32x4xf32>, vector<8x4xf32> -> vector<8x4xf32>
    %c32_19 = arith.constant 32 : index
    %c0_20 = arith.constant 0 : index
    %22 = vector.load %arg5[%c32_19, %c0_20] : memref<33x4xf32, #tpu.memory_space<vmem>>, vector<1x4xf32>
    %23 = vector.broadcast %22 : vector<1x4xf32> to vector<8x4xf32>
    %24 = arith.addf %21, %23 : vector<8x4xf32>
    %25 = math.tanh %24 : vector<8x4xf32>
    %cst_21 = arith.constant 1.000000e+00 : f32
    %26 = vector.broadcast %cst_21 : f32 to vector<8x4xf32>
    %27 = arith.addf %25, %26 : vector<8x4xf32>
    %cst_22 = arith.constant 3.500000e+00 : f32
    %28 = vector.broadcast %cst_22 : f32 to vector<8x4xf32>
    %29 = arith.mulf %28, %27 : vector<8x4xf32>
    %cst_23 = arith.constant -5.000000e+00 : f32
    %30 = vector.broadcast %cst_23 : f32 to vector<8x4xf32>
    %31 = arith.addf %30, %29 : vector<8x4xf32>
    %32 = math.exp %31 : vector<8x4xf32>
    %33 = math.tanh %19 : vector<8x4xf32>
    %34 = tpu.concatenate %19, %32, %33 in 1 : vector<8x4xf32>, vector<8x4xf32>, vector<8x4xf32> -> vector<8x12xf32>
    %c0_24 = arith.constant 0 : index
    %c0_25 = arith.constant 0 : index
    %35 = vector.load %arg6[%c0_24, %c0_25] : memref<8x12xf32, #tpu.memory_space<vmem>>, vector<8x12xf32>
    tpu.vector_store %arg6[%c0_24, %c0_25], %34 {strides = array<i32>} : memref<8x12xf32, #tpu.memory_space<vmem>>, vector<8x12xf32>,
    return
  }
  func.func @transform_0(%arg0: i32) -> (i32, i32) {
    %c0_i32 = arith.constant 0 : i32
    %c0_i32_0 = arith.constant 0 : i32
    return %arg0, %c0_i32 : i32, i32
  }
  func.func @transform_1(%arg0: i32) -> (i32, i32) {
    %c0_i32 = arith.constant 0 : i32
    %c0_i32_0 = arith.constant 0 : i32
    %c0_i32_1 = arith.constant 0 : i32
    return %c0_i32, %c0_i32_0 : i32, i32
  }
  func.func @transform_2(%arg0: i32) -> (i32, i32) {
    %c0_i32 = arith.constant 0 : i32
    %c0_i32_0 = arith.constant 0 : i32
    %c0_i32_1 = arith.constant 0 : i32
    return %c0_i32, %c0_i32_0 : i32, i32
  }
  func.func @transform_3(%arg0: i32) -> (i32, i32) {
    %c0_i32 = arith.constant 0 : i32
    %c0_i32_0 = arith.constant 0 : i32
    %c0_i32_1 = arith.constant 0 : i32
    return %c0_i32, %c0_i32_0 : i32, i32
  }
  func.func @transform_4(%arg0: i32) -> (i32, i32) {
    %c0_i32 = arith.constant 0 : i32
    %c0_i32_0 = arith.constant 0 : i32
    %c0_i32_1 = arith.constant 0 : i32
    return %c0_i32, %c0_i32_0 : i32, i32
  }
  func.func @transform_5(%arg0: i32) -> (i32, i32) {
    %c0_i32 = arith.constant 0 : i32
    %c0_i32_0 = arith.constant 0 : i32
    return %arg0, %c0_i32 : i32, i32
  }
}

</mosaic_0001>

<llo_original>
// kernel: diag_gaussian_actor.1
$region0: #{diag_gaussian_actor.1}
  #allocation0 [shape = 'u32[]', space=smem, size = 0x4, offset = 0x4, fixed_abs, tag = 'smem constant byte address 0x4 - core index']
  #allocation1 [shape = 'u32[144,128]{1,0:T(1,128)}', space=vmem, size = 0x12000, scoped, tag = 'internal scratch']
  %s0 = inlined_call_operand.vmem [shape: f32[8,32], index: 0, kind: input, shape index: {}]
  %s1 = inlined_call_operand.vmem [shape: f32[33,32], index: 1, kind: input, shape index: {}]
  %s2 = inlined_call_operand.vmem [shape: f32[33,32], index: 2, kind: input, shape index: {}]
  %s3 = inlined_call_operand.vmem [shape: f32[33,4], index: 3, kind: input, shape index: {}]
  %s4 = inlined_call_operand.vmem [shape: f32[33,4], index: 4, kind: input, shape index: {}]
  %s5 = inlined_call_operand.vmem [shape: f32[8,12], index: 5, kind: output, shape index: {}]
  %s6 = sld [smem:[#allocation0]]
  $region30: #{diag_gaussian_actor.1} parent=0
    _
  %s8 = ssub.s32 1, %s6
  %s9 = scalar_select 0, %s8, %s6
  // Predicated region
  $region2: #{diag_gaussian_actor.1} parent=0 // pred_check
    _
  $region3: #{diag_gaussian_actor.1} parent=0 // pred_check_branch
    %11 = sbr.rel (0) target = $region5
  $region4: #{diag_gaussian_actor.1} parent=0 // pred_region
    _
  $region5: #{diag_gaussian_actor.1} parent=0 // pred_fallthru
    _
  // Predicated region
  $region6: #{diag_gaussian_actor.1} parent=0 // pred_check
    _
  $region7: #{diag_gaussian_actor.1} parent=0 // pred_check_branch
    %13 = sbr.rel (0) target = $region9
  $region8: #{diag_gaussian_actor.1} parent=0 // pred_region
    _
  $region9: #{diag_gaussian_actor.1} parent=0 // pred_fallthru
    _
  // Predicated region
  $region10: #{diag_gaussian_actor.1} parent=0 // pred_check
    _
  $region11: #{diag_gaussian_actor.1} parent=0 // pred_check_branch
    %15 = sbr.rel (0) target = $region13
  $region12: #{diag_gaussian_actor.1} parent=0 // pred_region
    _
  $region13: #{diag_gaussian_actor.1} parent=0 // pred_fallthru
    _
  // Predicated region
  $region14: #{diag_gaussian_actor.1} parent=0 // pred_check
    _
  $region15: #{diag_gaussian_actor.1} parent=0 // pred_check_branch
    %17 = sbr.rel (0) target = $region17
  $region16: #{diag_gaussian_actor.1} parent=0 // pred_region
    _
  $region17: #{diag_gaussian_actor.1} parent=0 // pred_fallthru
    _
  // Predicated region
  $region18: #{diag_gaussian_actor.1} parent=0 // pred_check
    _
  $region19: #{diag_gaussian_actor.1} parent=0 // pred_check_branch
    %19 = sbr.rel (0) target = $region21
  $region20: #{diag_gaussian_actor.1} parent=0 // pred_region
    _
  $region21: #{diag_gaussian_actor.1} parent=0 // pred_fallthru
    _
  %v20 = vld [vmem:[%s0] sm:$0xff]
  %v21 = vld [vmem:[%s1] sm:$0xff]
  %v22 = vld [vmem:[%s1 + $0x8] sm:$0xff]
  %v23 = vld [vmem:[%s1 + $0x10] sm:$0xff]
  %v24 = vld [vmem:[%s1 + $0x18] sm:$0xff]
  %v25 = vld [vmem:[%s1 + $0x20] sm:$0x1]
  %v26 = vlaneseq
  %v27 = vshrl.u32 %v26, 7
  %v28 = vsub.s32 0, %v27
  %v29 = vrot.slane %v25, %v28
  %vm30 = vcmask 261120
  %v32 = vsel %vm30, %v20, 0
  %34 = vmatprep.subr.mxu0 0.0
  %35 = vmatpush1.msra.mxu0 %v21
  %36 = vmatprep.subr.mxu0 0.0
  %37 = vmatpush1.msra.mxu0 %v22
  %38 = vmatprep.subr.mxu0 0.0
  %39 = vmatpush1.msra.mxu0 %v23
  %40 = vmatprep.subr.mxu0 0.0
  %41 = vmatpush1.msra.mxu0 %v24
  %42 = vmatprep.subr.mxu0 0.0
  %43 = vmatpush1.msra.mxu0 0.0
  %44 = vmatprep.subr.mxu0 0.0
  %45 = vmatpush1.msra.mxu0 0.0
  %46 = vmatprep.subr.mxu0 0.0
  %47 = vmatpush1.msra.mxu0 0.0
  %48 = vmatprep.subr.mxu0 0.0
  %49 = vmatpush1.msra.mxu0 0.0
  %50 = vmatprep.subr.mxu0 0.0
  %51 = vmatpush1.msra.mxu0 0.0
  %52 = vmatprep.subr.mxu0 0.0
  %53 = vmatpush1.msra.mxu0 0.0
  %54 = vmatprep.subr.mxu0 0.0
  %55 = vmatpush1.msra.mxu0 0.0
  %56 = vmatprep.subr.mxu0 0.0
  %57 = vmatpush1.msra.mxu0 0.0
  %58 = vmatprep.subr.mxu0 0.0
  %59 = vmatpush1.msra.mxu0 0.0
  %60 = vmatprep.subr.mxu0 0.0
  %61 = vmatpush1.msra.mxu0 0.0
  %62 = vmatprep.subr.mxu0 0.0
  %63 = vmatpush1.msra.mxu0 0.0
  %64 = vmatprep.subr.mxu0 0.0
  %65 = vmatpush1.msra.mxu0 0.0
  %66 = vmatprep.subr.mxu0 0.0
  %67 = vmatpush1.msra.mxu0 0.0
  %68 = vmatprep.subr.mxu0 0.0
  %69 = vmatpush1.msra.mxu0 0.0
  %70 = vmatprep.subr.mxu0 0.0
  %71 = vmatpush1.msra.mxu0 0.0
  %72 = vmatprep.subr.mxu0 0.0
  %73 = vmatpush1.msra.mxu0 0.0
  %74 = vmatprep.subr.mxu0 0.0
  %75 = vmatpush1.msra.mxu0 0.0
  %76 = vmatprep.subr.mxu0 0.0
  %77 = vmatpush1.msra.mxu0 0.0
  %78 = vmatprep.subr.mxu0 0.0
  %79 = vmatpush1.msra.mxu0 0.0
  %80 = vmatprep.subr.mxu0 0.0
  %81 = vmatpush1.msra.mxu0 0.0
  %82 = vmatprep.subr.mxu0 0.0
  %83 = vmatpush1.msra.mxu0 0.0
  %84 = vmatprep.subr.mxu0 0.0
  %85 = vmatpush1.msra.mxu0 0.0
  %86 = vmatprep.subr.mxu0 0.0
  %87 = vmatpush1.msra.mxu0 0.0
  %88 = vmatprep.subr.mxu0 0.0
  %89 = vmatpush1.msra.mxu0 0.0
  %90 = vmatprep.subr.mxu0 0.0
  %91 = vmatpush1.msra.mxu0 0.0
  %92 = vmatprep.subr.mxu0 0.0
  %93 = vmatpush1.msra.mxu0 0.0
  %94 = vmatprep.subr.mxu0 0.0
  %95 = vmatpush1.msra.mxu0 0.0
  %96 = vmatprep.subr.mxu0 0.0
  %97 = vmatpush1.msra.mxu0 0.0
  %98 = vmatprep.mubr.f32.mxu0 0.0
  %99 = vmatmul.mubr.f32.gmra.mrb[0].mxu0 %v32
  %v100 = vpop.f32.mrb[0].mxu0
  %v101 = vadd.f32 %v29, %v100
  %v102 = vpop.f32.mrb[0].mxu0
  %103 = vdwg.mxu0
  %v104 = vmax.f32 %v101, 0.0
  %v105 = vld [vmem:[%s2] sm:$0xff]
  %v106 = vld [vmem:[%s2 + $0x8] sm:$0xff]
  %v107 = vld [vmem:[%s2 + $0x10] sm:$0xff]
  %v108 = vld [vmem:[%s2 + $0x18] sm:$0xff]
  %v109 = vld [vmem:[%s2 + $0x20] sm:$0x1]
  %v110 = vlaneseq
  %v111 = vshrl.u32 %v110, 7
  %v112 = vsub.s32 0, %v111
  %v113 = vrot.slane %v109, %v112
  %v115 = vsel %vm30, %v104, 0
  %117 = vmatprep.subr.mxu0 0.0
  %118 = vmatpush1.msra.mxu0 %v105
  %119 = vmatprep.subr.mxu0 0.0
  %120 = vmatpush1.msra.mxu0 %v106
  %121 = vmatprep.subr.mxu0 0.0
  %122 = vmatpush1.msra.mxu0 %v107
  %123 = vmatprep.subr.mxu0 0.0
  %124 = vmatpush1.msra.mxu0 %v108
  %125 = vmatprep.subr.mxu0 0.0
  %126 = vmatpush1.msra.mxu0 0.0
  %127 = vmatprep.subr.mxu0 0.0
  %128 = vmatpush1.msra.mxu0 0.0
  %129 = vmatprep.subr.mxu0 0.0
  %130 = vmatpush1.msra.mxu0 0.0
  %131 = vmatprep.subr.mxu0 0.0
  %132 = vmatpush1.msra.mxu0 0.0
  %133 = vmatprep.subr.mxu0 0.0
  %134 = vmatpush1.msra.mxu0 0.0
  %135 = vmatprep.subr.mxu0 0.0
  %136 = vmatpush1.msra.mxu0 0.0
  %137 = vmatprep.subr.mxu0 0.0
  %138 = vmatpush1.msra.mxu0 0.0
  %139 = vmatprep.subr.mxu0 0.0
  %140 = vmatpush1.msra.mxu0 0.0
  %141 = vmatprep.subr.mxu0 0.0
  %142 = vmatpush1.msra.mxu0 0.0
  %143 = vmatprep.subr.mxu0 0.0
  %144 = vmatpush1.msra.mxu0 0.0
  %145 = vmatprep.subr.mxu0 0.0
  %146 = vmatpush1.msra.mxu0 0.0
  %147 = vmatprep.subr.mxu0 0.0
  %148 = vmatpush1.msra.mxu0 0.0
  %149 = vmatprep.subr.mxu0 0.0
  %150 = vmatpush1.msra.mxu0 0.0
  %151 = vmatprep.subr.mxu0 0.0
  %152 = vmatpush1.msra.mxu0 0.0
  %153 = vmatprep.subr.mxu0 0.0
  %154 = vmatpush1.msra.mxu0 0.0
  %155 = vmatprep.subr.mxu0 0.0
  %156 = vmatpush1.msra.mxu0 0.0
  %157 = vmatprep.subr.mxu0 0.0
  %158 = vmatpush1.msra.mxu0 0.0
  %159 = vmatprep.subr.mxu0 0.0
  %160 = vmatpush1.msra.mxu0 0.0
  %161 = vmatprep.subr.mxu0 0.0
  %162 = vmatpush1.msra.mxu0 0.0
  %163 = vmatprep.subr.mxu0 0.0
  %164 = vmatpush1.msra.mxu0 0.0
  %165 = vmatprep.subr.mxu0 0.0
  %166 = vmatpush1.msra.mxu0 0.0
  %167 = vmatprep.subr.mxu0 0.0
  %168 = vmatpush1.msra.mxu0 0.0
  %169 = vmatprep.subr.mxu0 0.0
  %170 = vmatpush1.msra.mxu0 0.0
  %171 = vmatprep.subr.mxu0 0.0
  %172 = vmatpush1.msra.mxu0 0.0
  %173 = vmatprep.subr.mxu0 0.0
  %174 = vmatpush1.msra.mxu0 0.0
  %175 = vmatprep.subr.mxu0 0.0
  %176 = vmatpush1.msra.mxu0 0.0
  %177 = vmatprep.subr.mxu0 0.0
  %178 = vmatpush1.msra.mxu0 0.0
  %179 = vmatprep.subr.mxu0 0.0
  %180 = vmatpush1.msra.mxu0 0.0
  %181 = vmatprep.mubr.f32.mxu0 0.0
  %182 = vmatmul.mubr.f32.gmra.mrb[0].mxu0 %v115
  %v183 = vpop.f32.mrb[0].mxu0
  %v184 = vadd.f32 %v113, %v183
  %v185 = vpop.f32.mrb[0].mxu0
  %186 = vdwg.mxu0
  %v187 = vmax.f32 %v184, 0.0
  %v188 = vld [vmem:[%s3] sm:$0xff]
  %v189 = vld [vmem:[%s3 + $0x8] sm:$0xff]
  %v190 = vld [vmem:[%s3 + $0x10] sm:$0xff]
  %v191 = vld [vmem:[%s3 + $0x18] sm:$0xff]
  %v192 = vld [vmem:[%s3 + $0x20] sm:$0x1]
  %v193 = vlaneseq
  %v194 = vshrl.u32 %v193, 7
  %v195 = vsub.s32 0, %v194
  %v196 = vrot.slane %v192, %v195
  %v198 = vsel %vm30, %v187, 0
  %200 = vmatprep.subr.mxu0 0.0
  %201 = vmatpush1.msra.mxu0 %v188
  %202 = vmatprep.subr.mxu0 0.0
  %203 = vmatpush1.msra.mxu0 %v189
  %204 = vmatprep.subr.mxu0 0.0
  %205 = vmatpush1.msra.mxu0 %v190
  %206 = vmatprep.subr.mxu0 0.0
  %207 = vmatpush1.msra.mxu0 %v191
  %208 = vmatprep.subr.mxu0 0.0
  %209 = vmatpush1.msra.mxu0 0.0
  %210 = vmatprep.subr.mxu0 0.0
  %211 = vmatpush1.msra.mxu0 0.0
  %212 = vmatprep.subr.mxu0 0.0
  %213 = vmatpush1.msra.mxu0 0.0
  %214 = vmatprep.subr.mxu0 0.0
  %215 = vmatpush1.msra.mxu0 0.0
  %216 = vmatprep.subr.mxu0 0.0
  %217 = vmatpush1.msra.mxu0 0.0
  %218 = vmatprep.subr.mxu0 0.0
  %219 = vmatpush1.msra.mxu0 0.0
  %220 = vmatprep.subr.mxu0 0.0
  %221 = vmatpush1.msra.mxu0 0.0
  %222 = vmatprep.subr.mxu0 0.0
  %223 = vmatpush1.msra.mxu0 0.0
  %224 = vmatprep.subr.mxu0 0.0
  %225 = vmatpush1.msra.mxu0 0.0
  %226 = vmatprep.subr.mxu0 0.0
  %227 = vmatpush1.msra.mxu0 0.0
  %228 = vmatprep.subr.mxu0 0.0
  %229 = vmatpush1.msra.mxu0 0.0
  %230 = vmatprep.subr.mxu0 0.0
  %231 = vmatpush1.msra.mxu0 0.0
  %232 = vmatprep.subr.mxu0 0.0
  %233 = vmatpush1.msra.mxu0 0.0
  %234 = vmatprep.subr.mxu0 0.0
  %235 = vmatpush1.msra.mxu0 0.0
  %236 = vmatprep.subr.mxu0 0.0
  %237 = vmatpush1.msra.mxu0 0.0
  %238 = vmatprep.subr.mxu0 0.0
  %239 = vmatpush1.msra.mxu0 0.0
  %240 = vmatprep.subr.mxu0 0.0
  %241 = vmatpush1.msra.mxu0 0.0
  %242 = vmatprep.subr.mxu0 0.0
  %243 = vmatpush1.msra.mxu0 0.0
  %244 = vmatprep.subr.mxu0 0.0
  %245 = vmatpush1.msra.mxu0 0.0
  %246 = vmatprep.subr.mxu0 0.0
  %247 = vmatpush1.msra.mxu0 0.0
  %248 = vmatprep.subr.mxu0 0.0
  %249 = vmatpush1.msra.mxu0 0.0
  %250 = vmatprep.subr.mxu0 0.0
  %251 = vmatpush1.msra.mxu0 0.0
  %252 = vmatprep.subr.mxu0 0.0
  %253 = vmatpush1.msra.mxu0 0.0
  %254 = vmatprep.subr.mxu0 0.0
  %255 = vmatpush1.msra.mxu0 0.0
  %256 = vmatprep.subr.mxu0 0.0
  %257 = vmatpush1.msra.mxu0 0.0
  %258 = vmatprep.subr.mxu0 0.0
  %259 = vmatpush1.msra.mxu0 0.0
  %260 = vmatprep.subr.mxu0 0.0
  %261 = vmatpush1.msra.mxu0 0.0
  %262 = vmatprep.subr.mxu0 0.0
  %263 = vmatpush1.msra.mxu0 0.0
  %264 = vmatprep.mubr.f32.mxu0 0.0
  %265 = vmatmul.mubr.f32.gmra.mrb[0].mxu0 %v198
  %v266 = vpop.f32.mrb[0].mxu0
  %v267 = vadd.f32 %v196, %v266
  %v268 = vpop.f32.mrb[0].mxu0
  %269 = vdwg.mxu0
  %v270 = vld [vmem:[%s4] sm:$0xff]
  %v271 = vld [vmem:[%s4 + $0x8] sm:$0xff]
  %v272 = vld [vmem:[%s4 + $0x10] sm:$0xff]
  %v273 = vld [vmem:[%s4 + $0x18] sm:$0xff]
  %v274 = vld [vmem:[%s4 + $0x20] sm:$0x1]
  %v275 = vlaneseq
  %v276 = vshrl.u32 %v275, 7
  %v277 = vsub.s32 0, %v276
  %v278 = vrot.slane %v274, %v277
  %279 = vmatprep.subr.mxu0 0.0
  %280 = vmatpush1.msra.mxu0 %v270
  %281 = vmatprep.subr.mxu0 0.0
  %282 = vmatpush1.msra.mxu0 %v271
  %283 = vmatprep.subr.mxu0 0.0
  %284 = vmatpush1.msra.mxu0 %v272
  %285 = vmatprep.subr.mxu0 0.0
  %286 = vmatpush1.msra.mxu0 %v273
  %287 = vmatprep.subr.mxu0 0.0
  %288 = vmatpush1.msra.mxu0 0.0
  %289 = vmatprep.subr.mxu0 0.0
  %290 = vmatpush1.msra.mxu0 0.0
  %291 = vmatprep.subr.mxu0 0.0
  %292 = vmatpush1.msra.mxu0 0.0
  %293 = vmatprep.subr.mxu0 0.0
  %294 = vmatpush1.msra.mxu0 0.0
  %295 = vmatprep.subr.mxu0 0.0
  %296 = vmatpush1.msra.mxu0 0.0
  %297 = vmatprep.subr.mxu0 0.0
  %298 = vmatpush1.msra.mxu0 0.0
  %299 = vmatprep.subr.mxu0 0.0
  %300 = vmatpush1.msra.mxu0 0.0
  %301 = vmatprep.subr.mxu0 0.0
  %302 = vmatpush1.msra.mxu0 0.0
  %303 = vmatprep.subr.mxu0 0.0
  %304 = vmatpush1.msra.mxu0 0.0
  %305 = vmatprep.subr.mxu0 0.0
  %306 = vmatpush1.msra.mxu0 0.0
  %307 = vmatprep.subr.mxu0 0.0
  %308 = vmatpush1.msra.mxu0 0.0
  %309 = vmatprep.subr.mxu0 0.0
  %310 = vmatpush1.msra.mxu0 0.0
  %311 = vmatprep.subr.mxu0 0.0
  %312 = vmatpush1.msra.mxu0 0.0
  %313 = vmatprep.subr.mxu0 0.0
  %314 = vmatpush1.msra.mxu0 0.0
  %315 = vmatprep.subr.mxu0 0.0
  %316 = vmatpush1.msra.mxu0 0.0
  %317 = vmatprep.subr.mxu0 0.0
  %318 = vmatpush1.msra.mxu0 0.0
  %319 = vmatprep.subr.mxu0 0.0
  %320 = vmatpush1.msra.mxu0 0.0
  %321 = vmatprep.subr.mxu0 0.0
  %322 = vmatpush1.msra.mxu0 0.0
  %323 = vmatprep.subr.mxu0 0.0
  %324 = vmatpush1.msra.mxu0 0.0
  %325 = vmatprep.subr.mxu0 0.0
  %326 = vmatpush1.msra.mxu0 0.0
  %327 = vmatprep.subr.mxu0 0.0
  %328 = vmatpush1.msra.mxu0 0.0
  %329 = vmatprep.subr.mxu0 0.0
  %330 = vmatpush1.msra.mxu0 0.0
  %331 = vmatprep.subr.mxu0 0.0
  %332 = vmatpush1.msra.mxu0 0.0
  %333 = vmatprep.subr.mxu0 0.0
  %334 = vmatpush1.msra.mxu0 0.0
  %335 = vmatprep.subr.mxu0 0.0
  %336 = vmatpush1.msra.mxu0 0.0
  %337 = vmatprep.subr.mxu0 0.0
  %338 = vmatpush1.msra.mxu0 0.0
  %339 = vmatprep.subr.mxu0 0.0
  %340 = vmatpush1.msra.mxu0 0.0
  %341 = vmatprep.subr.mxu0 0.0
  %342 = vmatpush1.msra.mxu0 0.0
  %343 = vmatprep.mubr.f32.mxu0 0.0
  %344 = vmatmul.mubr.f32.gmra.mrb[0].mxu0 %v198
  %v345 = vpop.f32.mrb[0].mxu0
  %v346 = vadd.f32 %v278, %v345
  %v347 = vpop.f32.mrb[0].mxu0
  %348 = vdwg.mxu0
  %v349 = vtanh.pop %v346
  %v350 = vadd.f32 %v349, 1.0
  %v351 = vmul.f32 %v350, 3.5
  %v352 = vadd.f32 %v351, -5.0
  %v353 = vmul.f32 %v352, 1.442695
  %v354 = vpow.pop %v353
  %v355 = vtanh.pop %v267
  %357 = vrot.lane.b32.xlu0 %v354, 4
  %v358 = vpop.permute.xlu0 %357
  %361 = vrot.lane.b32.xlu0 %v355, 8
  %v362 = vpop.permute.xlu0 %361
  %vm364 = vcmask 31744
  %v365 = vsel %vm364, %v267, %v358
  %vm366 = vcmask 64512
  %v367 = vsel %vm366, %v365, %v362
  %vm368 = vcmask 97280
  %369 = vst.msk [vmem:[%s5] sm:$0xff] %vm368, %v367
  // Predicated region
  $region22: #{diag_gaussian_actor.1} parent=0 // pred_check
    _
  $region23: #{diag_gaussian_actor.1} parent=0 // pred_check_branch
    %371 = sbr.rel (0) target = $region25
  $region24: #{diag_gaussian_actor.1} parent=0 // pred_region
    _
  $region25: #{diag_gaussian_actor.1} parent=0 // pred_fallthru
    _
  // Predicated region
  $region26: #{diag_gaussian_actor.1} parent=0 // pred_check
    _
  $region27: #{diag_gaussian_actor.1} parent=0 // pred_check_branch
    %373 = sbr.rel (0) target = $region29
  $region28: #{diag_gaussian_actor.1} parent=0 // pred_region
    _
  $region29: #{diag_gaussian_actor.1} parent=0 // pred_fallthru
    _

</llo_original>
